<compile_context>
chip_gen: v7x
topology: tpu7x:2x2x1
jax: 0.10.0
libtpu: 0.0.40
codegen_flags: <defaults>
</compile_context>

<pallas_src>
import functools

import numpy as np

import jax
import jax.numpy as jnp
from jax.experimental import pallas as pl
from jax.experimental.pallas import tpu as pltpu

BN_EPS = 1e-5
LEAKY_SLOPE = 0.1


def _tpu_vmem_capacity_bytes():
    """Per-generation VMEM capacity (v5e/v6e: 128 MiB, v7x: 64 MiB/TC)."""
    try:
        info = pltpu.get_tpu_info()
        cap = int(getattr(info, "vmem_capacity_bytes", 0))
        if cap > 0:
            return cap
    except Exception:
        pass
    return 64 * 1024 * 1024  # conservative fallback (v7x per-TensorCore)


def _build_structured_weights(weight, Wp, Wo):
    """(Cout, Cin, KH, KW) torch weights -> (KH, Wp*Cin, Wo*Cout) bf16.

    W[kh, (c+kw)*Cin + ci, c*Cout + o] = weight[o, ci, kh, kw]; all other
    entries are zero.  With this layout the conv for output rows r becomes
        y[r, :] = sum_kh  x2d[r+kh, :] @ W[kh]
    where x2d is the padded image viewed as (Hp, Wp*Cin): contiguous lane-dense
    row slices in, lane-dense (Wo*Cout) rows out -- zero relayout work.
    """
    Cout, Cin, KH, KW = weight.shape
    WpC, WC = Wp * Cin, Wo * Cout
    kh, kw, ci, c, o = np.meshgrid(np.arange(KH), np.arange(KW), np.arange(Cin),
                                   np.arange(Wo), np.arange(Cout), indexing="ij")
    p = (c + kw) * Cin + ci      # source lane in the (Hp, Wp*Cin) image view
    q = c * Cout + o             # destination lane in the (Ho, Wo*Cout) output
    vals = weight.astype(jnp.float32)[o.ravel(), ci.ravel(), kh.ravel(), kw.ravel()]
    w_big = jnp.zeros((KH, WpC, WC), jnp.float32)
    w_big = w_big.at[kh.ravel(), p.ravel(), q.ravel()].set(vals)
    return w_big.astype(jnp.bfloat16)


def _conv_rows(x_ref, w_ref, KH, Ho):
    """KH chained MXU matmuls (no interleaved elementwise) -> (Ho, Wo*Cout) f32."""
    acc = jnp.dot(x_ref[0, 0:Ho, :], w_ref[0], preferred_element_type=jnp.float32)
    for kh in range(1, KH):
        acc = acc + jnp.dot(x_ref[0, kh:kh + Ho, :], w_ref[kh],
                            preferred_element_type=jnp.float32)
    return acc


def _store_rows(o_ref, acc, b, Ho):
    row0 = b * Ho
    if Ho % 8 == 0:
        row0 = pl.multiple_of(row0, 8)   # aligned, unmasked sublane stores
    o_ref[pl.ds(row0, Ho), :] = acc.astype(o_ref.dtype)


def _conv_only_kernel(x_ref, w_ref, o_ref, *, KH, Ho):
    # Conv-only path: no statistics work at all (review: skip stats when
    # use_bn_act=False); final dtype emitted directly.
    b = pl.program_id(0)
    _store_rows(o_ref, _conv_rows(x_ref, w_ref, KH, Ho), b, Ho)


def _conv_bn_act_kernel(x_ref, w_ref, g_ref, gt_ref, gamma_ref, beta_ref, o_ref,
                        *, KH, Ho, inv_m):
    # x_ref : (1, Hp, Wp*Cin) bf16 image block for this batch index
    # w_ref : (KH, Wp*Cin, Wo*Cout) bf16 structured weights
    # g_ref : (Wo*Cout, Cout) f32  lane -> channel fold matrix
    # gt_ref: (Cout, Wo*Cout) f32  channel -> lane broadcast matrix
    # o_ref : (B*Ho, Wo*Cout) final-dtype, VMEM-resident across the whole grid
    b = pl.program_id(0)
    _store_rows(o_ref, _conv_rows(x_ref, w_ref, KH, Ho), b, Ho)

    @pl.when(b == pl.num_programs(0) - 1)
    def _():
        # Exact full-batch, two-pass (mean-centered) BatchNorm on the resident
        # conv output, then LeakyReLU(0.1), rewritten in place.  Reductions and
        # the per-channel fold/broadcast use the otherwise-idle MXU.
        y = o_ref[...].astype(jnp.float32)                 # (rows, WC)
        rows = y.shape[0]
        ones = jnp.ones((1, rows), jnp.float32)
        sum_lane = jnp.dot(ones, y, preferred_element_type=jnp.float32)       # (1, WC)
        mean_c = jnp.dot(sum_lane, g_ref[...],
                         preferred_element_type=jnp.float32) * inv_m          # (1, Cout)
        mean_lane = jnp.dot(mean_c, gt_ref[...],
                            preferred_element_type=jnp.float32)               # (1, WC)
        centered = y - mean_lane
        sq_lane = jnp.dot(ones, centered * centered,
                          preferred_element_type=jnp.float32)                 # (1, WC)
        var_c = jnp.dot(sq_lane, g_ref[...],
                        preferred_element_type=jnp.float32) * inv_m           # (1, Cout)
        scale_c = gamma_ref[...] * jax.lax.rsqrt(var_c + BN_EPS)              # (1, Cout)
        scale_lane = jnp.dot(scale_c, gt_ref[...], preferred_element_type=jnp.float32)
        beta_lane = jnp.dot(beta_ref[...], gt_ref[...], preferred_element_type=jnp.float32)
        z = centered * scale_lane + beta_lane
        o_ref[...] = jnp.where(z >= 0, z, LEAKY_SLOPE * z).astype(o_ref.dtype)


def cnn_block_forward_nhwc(x_nhwc, weight, gamma, beta, *,
                           stride=1, padding=1, use_bn_act=True, bias=None):
    """CNNBlock forward in NHWC (keep NHWC across stacked blocks)."""
    # TODO(synk): stride > 1 / dilation / groups Pallas path.
    assert stride == 1, "Pallas path currently implements stride=1"
    # nn.Conv2d(..., bias=bn_act): a bias exists only when BN follows and is
    # then exactly cancelled by the BN mean subtraction -> never applied.
    del bias

    B, H, W, Cin = x_nhwc.shape
    Cout, Cin_w, KH, KW = weight.shape
    assert Cin == Cin_w, "channel mismatch"

    Hp, Wp = H + 2 * padding, W + 2 * padding
    Ho, Wo = Hp - KH + 1, Wp - KW + 1
    WpC, WC = Wp * Cin, Wo * Cout
    out_dtype = x_nhwc.dtype

    # Per-generation VMEM budgeting (review: no fixed 32 MiB cap / row targets).
    vmem_cap = _tpu_vmem_capacity_bytes()
    vmem_limit = min(vmem_cap // 2, 96 * 1024 * 1024)
    out_itemsize = jnp.dtype(out_dtype).itemsize
    est_vmem = (B * Ho * WC * (out_itemsize + 4)        # resident out + f32 epilogue temps
                + 2 * Hp * WpC * 2                      # double-buffered bf16 image block
                + 2 * KH * WpC * WC * 2                 # double-buffered bf16 weights
                + 4 * (WC * Cout + Cout * WC + 2 * Cout) * 4)
    if est_vmem > vmem_limit - (4 << 20):
        # TODO(synk): tiled two-pass path (halo row DMA, MXU-shaped (M, Cout>=128)
        # tiles, bf16 HBM intermediate) for activations that exceed the fused
        # VMEM-resident budget.
        raise NotImplementedError(
            f"activation too large for fused VMEM-resident CNNBlock path "
            f"(needs ~{est_vmem} B, budget {vmem_limit} B)")

    # Layout-only glue: cast once to the bf16 compute dtype, pad in bf16
    # (review: no f32 up-cast + pad round trip), free reshape to (B, Hp, Wp*Cin).
    xb = x_nhwc.astype(jnp.bfloat16)
    xp = jnp.pad(xb, ((0, 0), (padding, padding), (padding, padding), (0, 0)))
    x2 = xp.reshape(B, Hp, WpC)
    w_big = _build_structured_weights(weight, Wp, Wo)          # (KH, WpC, WC) bf16

    common_in_specs = [
        pl.BlockSpec((1, Hp, WpC), lambda b: (b, 0, 0)),       # one image per step
        pl.BlockSpec((KH, WpC, WC), lambda b: (0, 0, 0)),      # weights stay resident
    ]
    out_spec = pl.BlockSpec((B * Ho, WC), lambda b: (0, 0))    # VMEM-resident output
    out_shape = jax.ShapeDtypeStruct((B * Ho, WC), out_dtype)
    cparams = pltpu.CompilerParams(dimension_semantics=("arbitrary",),
                                   vmem_limit_bytes=vmem_limit)

    if not use_bn_act:
        out2d = pl.pallas_call(
            functools.partial(_conv_only_kernel, KH=KH, Ho=Ho),
            grid=(B,),
            in_specs=common_in_specs,
            out_specs=out_spec,
            out_shape=out_shape,
            compiler_params=cparams,
        )(x2, w_big)
    else:
        # Tiny constant fold/broadcast matrices so per-channel statistics stay
        # on the MXU (no in-kernel reshapes or strided lane reductions).
        eye = jnp.eye(Cout, dtype=jnp.float32)
        g_mat = jnp.tile(eye, (Wo, 1))                         # (WC, Cout)
        gt_mat = jnp.tile(eye, (1, Wo))                        # (Cout, WC)
        gamma2 = gamma.reshape(1, Cout).astype(jnp.float32)
        beta2 = beta.reshape(1, Cout).astype(jnp.float32)
        inv_m = 1.0 / float(B * Ho * Wo)

        out2d = pl.pallas_call(
            functools.partial(_conv_bn_act_kernel, KH=KH, Ho=Ho, inv_m=inv_m),
            grid=(B,),
            in_specs=common_in_specs + [
                pl.BlockSpec((WC, Cout), lambda b: (0, 0)),
                pl.BlockSpec((Cout, WC), lambda b: (0, 0)),
                pl.BlockSpec((1, Cout), lambda b: (0, 0)),
                pl.BlockSpec((1, Cout), lambda b: (0, 0)),
            ],
            out_specs=out_spec,
            out_shape=out_shape,
            compiler_params=cparams,
        )(x2, w_big, g_mat, gt_mat, gamma2, beta2)

    return out2d.reshape(B, Ho, Wo, Cout)


def cnn_block_forward(x_nchw, weight, gamma, beta, *,
                      stride=1, padding=1, use_bn_act=True, bias=None):
    """NCHW wrapper matching the PyTorch module's interface."""
    x = jnp.transpose(x_nchw, (0, 2, 3, 1))
    y = cnn_block_forward_nhwc(x, weight, gamma, beta, stride=stride,
                               padding=padding, use_bn_act=use_bn_act, bias=bias)
    return jnp.transpose(y, (0, 3, 1, 2))


def _reference(x_nchw, weight, gamma, beta, *, padding=1, use_bn_act=True):
    """Pure-JAX reference with matching bf16 conv operands, f32 accumulation."""
    x = jnp.transpose(x_nchw, (0, 2, 3, 1)).astype(jnp.bfloat16)
    w = jnp.transpose(weight, (2, 3, 1, 0)).astype(jnp.bfloat16)
    y = jax.lax.conv_general_dilated(
        x, w, window_strides=(1, 1),
        padding=[(padding, padding), (padding, padding)],
        dimension_numbers=("NHWC", "HWIO", "NHWC"),
        preferred_element_type=jnp.float32)
    if use_bn_act:
        mean = jnp.mean(y, axis=(0, 1, 2))
        var = jnp.mean((y - mean) ** 2, axis=(0, 1, 2))
        y = (y - mean) * jax.lax.rsqrt(var + BN_EPS) * gamma + beta
        y = jnp.where(y >= 0, y, LEAKY_SLOPE * y)
    return jnp.transpose(y, (0, 3, 1, 2)).astype(jnp.float32)


if __name__ == "__main__":
    key = jax.random.PRNGKey(0)
    kx, kw_, kg, kb = jax.random.split(key, 4)

    # Shapes implied by the module: Conv2d(4 -> 8, kernel_size=3, padding=1)
    B, Cin, H, W = 2, 4, 16, 16
    Cout, KH, KW = 8, 3, 3

    x = jax.random.normal(kx, (B, Cin, H, W), jnp.float32)
    fan_in = Cin * KH * KW
    bound = 1.0 / float(np.sqrt(fan_in))
    weight = jax.random.uniform(kw_, (Cout, Cin, KH, KW), jnp.float32, -bound, bound)
    # BatchNorm2d params (defaults are 1/0; mild perturbation exercises the path).
    gamma = 1.0 + 0.1 * jax.random.normal(kg, (Cout,), jnp.float32)
    beta = 0.1 * jax.random.normal(kb, (Cout,), jnp.float32)

    # bn_act=True path: Conv -> BN (train-mode batch stats) -> LeakyReLU(0.1)
    out = cnn_block_forward(x, weight, gamma, beta,
                            stride=1, padding=1, use_bn_act=True)
    out = jax.block_until_ready(out)
    assert out.shape == (B, Cout, H, W), out.shape
    assert bool(jnp.all(jnp.isfinite(out)))
    ref = _reference(x, weight, gamma, beta, padding=1, use_bn_act=True)
    err = float(jnp.max(jnp.abs(out - ref)))
    assert err < 1e-2, f"bn_act=True max abs err {err}"

    # bn_act=False path: bare conv (no bias, per nn.Conv2d(..., bias=False))
    out2 = cnn_block_forward(x, weight, gamma, beta,
                             stride=1, padding=1, use_bn_act=False)
    out2 = jax.block_until_ready(out2)
    assert out2.shape == (B, Cout, H, W), out2.shape
    ref2 = _reference(x, weight, gamma, beta, padding=1, use_bn_act=False)
    err2 = float(jnp.max(jnp.abs(out2 - ref2)))
    assert err2 < 1e-2, f"bn_act=False max abs err {err2}"

    print("KERNEL_OK")
</pallas_src>

<mosaic_0001>
module attributes {stable_mosaic.version = 11 : i64} {
  func.func @_conv_bn_act_kernel(%arg0: i32, %arg1: memref<1x18x72xbf16, #tpu.memory_space<vmem>>, %arg2: memref<3x72x128xbf16, #tpu.memory_space<vmem>>, %arg3: memref<128x8xf32, #tpu.memory_space<vmem>>, %arg4: memref<8x128xf32, #tpu.memory_space<vmem>>, %arg5: memref<1x8xf32, #tpu.memory_space<vmem>>, %arg6: memref<1x8xf32, #tpu.memory_space<vmem>>, %arg7: memref<32x128xf32, #tpu.memory_space<vmem>>) attributes {dimension_semantics = [#tpu.dimension_semantics<arbitrary>], iteration_bounds = array<i64: 2>, scalar_prefetch = 0 : i64, scratch_operands = 0 : i64, tpu.core_type = #tpu.core_type<tc>, window_params = [{transform_indices = @transform_0, window_bounds = array<i64: 1, 18, 72>}, {pipeline_mode = #tpu.pipeline_mode<synchronous>, transform_indices = @transform_1, window_bounds = array<i64: 3, 72, 128>}, {pipeline_mode = #tpu.pipeline_mode<synchronous>, transform_indices = @transform_2, window_bounds = array<i64: 128, 8>}, {pipeline_mode = #tpu.pipeline_mode<synchronous>, transform_indices = @transform_3, window_bounds = array<i64: 8, 128>}, {pipeline_mode = #tpu.pipeline_mode<synchronous>, transform_indices = @transform_4, window_bounds = array<i64: 1, 8>}, {pipeline_mode = #tpu.pipeline_mode<synchronous>, transform_indices = @transform_5, window_bounds = array<i64: 1, 8>}, {pipeline_mode = #tpu.pipeline_mode<synchronous>, transform_indices = @transform_6, window_bounds = array<i64: 32, 128>}]} {
    %c0 = arith.constant 0 : index
    %c0_0 = arith.constant 0 : index
    %c0_1 = arith.constant 0 : index
    %0 = vector.load %arg1[%c0, %c0_0, %c0_1] : memref<1x18x72xbf16, #tpu.memory_space<vmem>>, vector<1x16x72xbf16>
    %1 = vector.shape_cast %0 : vector<1x16x72xbf16> to vector<16x72xbf16>
    %c0_2 = arith.constant 0 : index
    %c0_3 = arith.constant 0 : index
    %c0_4 = arith.constant 0 : index
    %2 = vector.load %arg2[%c0_2, %c0_3, %c0_4] : memref<3x72x128xbf16, #tpu.memory_space<vmem>>, vector<1x72x128xbf16>
    %3 = vector.shape_cast %2 : vector<1x72x128xbf16> to vector<72x128xbf16>
    %cst = arith.constant dense<0.000000e+00> : vector<16x128xf32>
    %4 = tpu.matmul %1, %3, %cst {dimension_numbers = #tpu.dot_dimension_numbers<[1], [0], [0], [1], [0, 0, 1, 1], [], []>} : vector<16x72xbf16>, vector<72x128xbf16>, vector<16x128xf32> -> vector<16x128xf32>
    %c0_5 = arith.constant 0 : index
    %c1 = arith.constant 1 : index
    %c0_6 = arith.constant 0 : index
    %5 = vector.load %arg1[%c0_5, %c1, %c0_6] : memref<1x18x72xbf16, #tpu.memory_space<vmem>>, vector<1x16x72xbf16>
    %6 = vector.shape_cast %5 : vector<1x16x72xbf16> to vector<16x72xbf16>
    %c1_7 = arith.constant 1 : index
    %c0_8 = arith.constant 0 : index
    %c0_9 = arith.constant 0 : index
    %7 = vector.load %arg2[%c1_7, %c0_8, %c0_9] : memref<3x72x128xbf16, #tpu.memory_space<vmem>>, vector<1x72x128xbf16>
    %8 = vector.shape_cast %7 : vector<1x72x128xbf16> to vector<72x128xbf16>
    %cst_10 = arith.constant dense<0.000000e+00> : vector<16x128xf32>
    %9 = tpu.matmul %6, %8, %cst_10 {dimension_numbers = #tpu.dot_dimension_numbers<[1], [0], [0], [1], [0, 0, 1, 1], [], []>} : vector<16x72xbf16>, vector<72x128xbf16>, vector<16x128xf32> -> vector<16x128xf32>
    %10 = arith.addf %4, %9 : vector<16x128xf32>
    %c0_11 = arith.constant 0 : index
    %c2 = arith.constant 2 : index
    %c0_12 = arith.constant 0 : index
    %11 = vector.load %arg1[%c0_11, %c2, %c0_12] : memref<1x18x72xbf16, #tpu.memory_space<vmem>>, vector<1x16x72xbf16>
    %12 = vector.shape_cast %11 : vector<1x16x72xbf16> to vector<16x72xbf16>
    %c2_13 = arith.constant 2 : index
    %c0_14 = arith.constant 0 : index
    %c0_15 = arith.constant 0 : index
    %13 = vector.load %arg2[%c2_13, %c0_14, %c0_15] : memref<3x72x128xbf16, #tpu.memory_space<vmem>>, vector<1x72x128xbf16>
    %14 = vector.shape_cast %13 : vector<1x72x128xbf16> to vector<72x128xbf16>
    %cst_16 = arith.constant dense<0.000000e+00> : vector<16x128xf32>
    %15 = tpu.matmul %12, %14, %cst_16 {dimension_numbers = #tpu.dot_dimension_numbers<[1], [0], [0], [1], [0, 0, 1, 1], [], []>} : vector<16x72xbf16>, vector<72x128xbf16>, vector<16x128xf32> -> vector<16x128xf32>
    %16 = arith.addf %10, %15 : vector<16x128xf32>
    %c16_i32 = arith.constant 16 : i32
    %17 = arith.muli %arg0, %c16_i32 : i32
    %18 = tpu.assume_multiple %17, 8 : i32
    %19 = arith.index_cast %18 : i32 to index
    %c0_17 = arith.constant 0 : index
    %20 = vector.load %arg7[%19, %c0_17] : memref<32x128xf32, #tpu.memory_space<vmem>>, vector<16x128xf32>
    tpu.vector_store %arg7[%19, %c0_17], %16 {strides = array<i32>} : memref<32x128xf32, #tpu.memory_space<vmem>>, vector<16x128xf32>,
    %c1_i32 = arith.constant 1 : i32
    %21 = arith.cmpi eq, %arg0, %c1_i32 : i32
    %22 = arith.extui %21 : i1 to i32
    %c0_i32 = arith.constant 0 : i32
    %23 = arith.cmpi ne, %22, %c0_i32 : i32
    scf.if %23 {
      %c0_18 = arith.constant 0 : index
      %c0_19 = arith.constant 0 : index
      %24 = vector.load %arg7[%c0_18, %c0_19] : memref<32x128xf32, #tpu.memory_space<vmem>>, vector<32x128xf32>
      %cst_20 = arith.constant 1.000000e+00 : f32
      %25 = vector.broadcast %cst_20 : f32 to vector<1x32xf32>
      %cst_21 = arith.constant dense<0.000000e+00> : vector<1x128xf32>
      %26 = tpu.matmul %25, %24, %cst_21 {dimension_numbers = #tpu.dot_dimension_numbers<[1], [0], [0], [1], [0, 0, 1, 1], [], []>} : vector<1x32xf32>, vector<32x128xf32>, vector<1x128xf32> -> vector<1x128xf32>
      %c0_22 = arith.constant 0 : index
      %c0_23 = arith.constant 0 : index
      %27 = vector.load %arg3[%c0_22, %c0_23] : memref<128x8xf32, #tpu.memory_space<vmem>>, vector<128x8xf32>
      %cst_24 = arith.constant dense<0.000000e+00> : vector<1x8xf32>
      %28 = tpu.matmul %26, %27, %cst_24 {dimension_numbers = #tpu.dot_dimension_numbers<[1], [0], [0], [1], [0, 0, 1, 1], [], []>} : vector<1x128xf32>, vector<128x8xf32>, vector<1x8xf32> -> vector<1x8xf32>
      %cst_25 = arith.constant 0.001953125 : f32
      %29 = vector.broadcast %cst_25 : f32 to vector<1x8xf32>
      %30 = arith.mulf %28, %29 : vector<1x8xf32>
      %c0_26 = arith.constant 0 : index
      %c0_27 = arith.constant 0 : index
      %31 = vector.load %arg4[%c0_26, %c0_27] : memref<8x128xf32, #tpu.memory_space<vmem>>, vector<8x128xf32>
      %cst_28 = arith.constant dense<0.000000e+00> : vector<1x128xf32>
      %32 = tpu.matmul %30, %31, %cst_28 {dimension_numbers = #tpu.dot_dimension_numbers<[1], [0], [0], [1], [0, 0, 1, 1], [], []>} : vector<1x8xf32>, vector<8x128xf32>, vector<1x128xf32> -> vector<1x128xf32>
      %33 = vector.broadcast %32 : vector<1x128xf32> to vector<32x128xf32>
      %34 = arith.subf %24, %33 : vector<32x128xf32>
      %35 = arith.mulf %34, %34 : vector<32x128xf32>
      %cst_29 = arith.constant dense<0.000000e+00> : vector<1x128xf32>
      %36 = tpu.matmul %25, %35, %cst_29 {dimension_numbers = #tpu.dot_dimension_numbers<[1], [0], [0], [1], [0, 0, 1, 1], [], []>} : vector<1x32xf32>, vector<32x128xf32>, vector<1x128xf32> -> vector<1x128xf32>
      %c0_30 = arith.constant 0 : index
      %c0_31 = arith.constant 0 : index
      %37 = vector.load %arg3[%c0_30, %c0_31] : memref<128x8xf32, #tpu.memory_space<vmem>>, vector<128x8xf32>
      %cst_32 = arith.constant dense<0.000000e+00> : vector<1x8xf32>
      %38 = tpu.matmul %36, %37, %cst_32 {dimension_numbers = #tpu.dot_dimension_numbers<[1], [0], [0], [1], [0, 0, 1, 1], [], []>} : vector<1x128xf32>, vector<128x8xf32>, vector<1x8xf32> -> vector<1x8xf32>
      %cst_33 = arith.constant 0.001953125 : f32
      %39 = vector.broadcast %cst_33 : f32 to vector<1x8xf32>
      %40 = arith.mulf %38, %39 : vector<1x8xf32>
      %c0_34 = arith.constant 0 : index
      %c0_35 = arith.constant 0 : index
      %41 = vector.load %arg5[%c0_34, %c0_35] : memref<1x8xf32, #tpu.memory_space<vmem>>, vector<1x8xf32>
      %cst_36 = arith.constant 9.99999974E-6 : f32
      %42 = vector.broadcast %cst_36 : f32 to vector<1x8xf32>
      %43 = arith.addf %40, %42 : vector<1x8xf32>
      %44 = math.rsqrt %43 : vector<1x8xf32>
      %45 = arith.mulf %41, %44 : vector<1x8xf32>
      %c0_37 = arith.constant 0 : index
      %c0_38 = arith.constant 0 : index
      %46 = vector.load %arg4[%c0_37, %c0_38] : memref<8x128xf32, #tpu.memory_space<vmem>>, vector<8x128xf32>
      %cst_39 = arith.constant dense<0.000000e+00> : vector<1x128xf32>
      %47 = tpu.matmul %45, %46, %cst_39 {dimension_numbers = #tpu.dot_dimension_numbers<[1], [0], [0], [1], [0, 0, 1, 1], [], []>} : vector<1x8xf32>, vector<8x128xf32>, vector<1x128xf32> -> vector<1x128xf32>
      %c0_40 = arith.constant 0 : index
      %c0_41 = arith.constant 0 : index
      %48 = vector.load %arg6[%c0_40, %c0_41] : memref<1x8xf32, #tpu.memory_space<vmem>>, vector<1x8xf32>
      %c0_42 = arith.constant 0 : index
      %c0_43 = arith.constant 0 : index
      %49 = vector.load %arg4[%c0_42, %c0_43] : memref<8x128xf32, #tpu.memory_space<vmem>>, vector<8x128xf32>
      %cst_44 = arith.constant dense<0.000000e+00> : vector<1x128xf32>
      %50 = tpu.matmul %48, %49, %cst_44 {dimension_numbers = #tpu.dot_dimension_numbers<[1], [0], [0], [1], [0, 0, 1, 1], [], []>} : vector<1x8xf32>, vector<8x128xf32>, vector<1x128xf32> -> vector<1x128xf32>
      %51 = vector.broadcast %47 : vector<1x128xf32> to vector<32x128xf32>
      %52 = arith.mulf %34, %51 : vector<32x128xf32>
      %53 = vector.broadcast %50 : vector<1x128xf32> to vector<32x128xf32>
      %54 = arith.addf %52, %53 : vector<32x128xf32>
      %cst_45 = arith.constant 0.000000e+00 : f32
      %55 = vector.broadcast %cst_45 : f32 to vector<32x128xf32>
      %56 = arith.cmpf oge, %54, %55 : vector<32x128xf32>
      %cst_46 = arith.constant 1.000000e-01 : f32
      %57 = vector.broadcast %cst_46 : f32 to vector<32x128xf32>
      %58 = arith.mulf %57, %54 : vector<32x128xf32>
      %59 = arith.select %56, %54, %58 : vector<32x128xi1>, vector<32x128xf32>
      %c0_47 = arith.constant 0 : index
      %c0_48 = arith.constant 0 : index
      %60 = vector.load %arg7[%c0_47, %c0_48] : memref<32x128xf32, #tpu.memory_space<vmem>>, vector<32x128xf32>
      tpu.vector_store %arg7[%c0_47, %c0_48], %59 {strides = array<i32>} : memref<32x128xf32, #tpu.memory_space<vmem>>, vector<32x128xf32>,
    } else {
    }
    return
  }
  func.func @transform_0(%arg0: i32) -> (i32, i32, i32) {
    %c0_i32 = arith.constant 0 : i32
    %c0_i32_0 = arith.constant 0 : i32
    %c0_i32_1 = arith.constant 0 : i32
    return %arg0, %c0_i32, %c0_i32_0 : i32, i32, i32
  }
  func.func @transform_1(%arg0: i32) -> (i32, i32, i32) {
    %c0_i32 = arith.constant 0 : i32
    %c0_i32_0 = arith.constant 0 : i32
    %c0_i32_1 = arith.constant 0 : i32
    %c0_i32_2 = arith.constant 0 : i32
    return %c0_i32, %c0_i32_0, %c0_i32_1 : i32, i32, i32
  }
  func.func @transform_2(%arg0: i32) -> (i32, i32) {
    %c0_i32 = arith.constant 0 : i32
    %c0_i32_0 = arith.constant 0 : i32
    %c0_i32_1 = arith.constant 0 : i32
    return %c0_i32, %c0_i32_0 : i32, i32
  }
  func.func @transform_3(%arg0: i32) -> (i32, i32) {
    %c0_i32 = arith.constant 0 : i32
    %c0_i32_0 = arith.constant 0 : i32
    %c0_i32_1 = arith.constant 0 : i32
    return %c0_i32, %c0_i32_0 : i32, i32
  }
  func.func @transform_4(%arg0: i32) -> (i32, i32) {
    %c0_i32 = arith.constant 0 : i32
    %c0_i32_0 = arith.constant 0 : i32
    %c0_i32_1 = arith.constant 0 : i32
    return %c0_i32, %c0_i32_0 : i32, i32
  }
  func.func @transform_5(%arg0: i32) -> (i32, i32) {
    %c0_i32 = arith.constant 0 : i32
    %c0_i32_0 = arith.constant 0 : i32
    %c0_i32_1 = arith.constant 0 : i32
    return %c0_i32, %c0_i32_0 : i32, i32
  }
  func.func @transform_6(%arg0: i32) -> (i32, i32) {
    %c0_i32 = arith.constant 0 : i32
    %c0_i32_0 = arith.constant 0 : i32
    %c0_i32_1 = arith.constant 0 : i32
    return %c0_i32, %c0_i32_0 : i32, i32
  }
}

</mosaic_0001>

<llo_original>
// kernel: tpu_custom_call.1
$region0: #{tpu_custom_call.1}
  #allocation0 [shape = 'u32[]', space=smem, size = 0x4, offset = 0x4, fixed_abs, tag = 'smem constant byte address 0x4 - core index']
  #allocation1 [shape = 'u32[144,128]{1,0:T(1,128)}', space=vmem, size = 0x12000, scoped, tag = 'internal scratch']
  %s0 = inlined_call_operand.vmem [shape: bf16[2,18,72], index: 0, kind: input, shape index: {}]
  %s1 = inlined_call_operand.vmem [shape: bf16[3,72,128], index: 1, kind: input, shape index: {}]
  %s2 = inlined_call_operand.vmem [shape: f32[128,8], index: 2, kind: input, shape index: {}]
  %s3 = inlined_call_operand.vmem [shape: f32[8,128], index: 3, kind: input, shape index: {}]
  %s4 = inlined_call_operand.vmem [shape: f32[1,8], index: 4, kind: input, shape index: {}]
  %s5 = inlined_call_operand.vmem [shape: f32[1,8], index: 5, kind: input, shape index: {}]
  %s6 = inlined_call_operand.hbm [shape: f32[32,128], index: 6, kind: output, shape index: {}]
  %s7 = sld [smem:[#allocation0]]
  $region61: #{tpu_custom_call.1} parent=0
    _
  %s9 = ssub.s32 1, %s7
  %s10 = scalar_select 0, %s9, %s7
  $region1: #{tpu_custom_call.1} parent=0
    #allocation2 [shape = 'u8[16384]{0}', space=vmem, size = 0x4000, scoped, tag = 'output window, operand 0, single buffered']
    #allocation3 [shape = 's32[2]{0}', space=sflag, size = 0x8, scoped, tag = 'scoped memory for tpu_custom_call.1']
    %11 = vsyncpa [#allocation3], 0
    loop: start=0, step=1, limit=4
    $region2: #{tpu_custom_call.1} parent=1 // loop_pre_header
      _
    $region3: #{tpu_custom_call.1} parent=1 // loop_header
      %s13 = sphi 0, %s17
      %p14 = scmp.ge.s32.totalorder %s13, 4
      %s23 = sphi 0, %s25
      %s26 = sphi 0, %s23
      %s27 = sphi 0, %s26
      %s43 = sphi 0, %s27
      %s47 = sphi 0, %s47
      %s49 = sphi 0, %s47
      %s50 = sphi 0, %s49
      %s64 = sphi 0, %s50
      %s68 = sphi 0, %s68
      %s70 = sphi 0, %s68
      %s71 = sphi 0, %s70
      %s85 = sphi 0, %s71
      %s89 = sphi 0, %s89
      %s91 = sphi 0, %s89
      %s92 = sphi 0, %s91
      %s106 = sphi 0, %s92
      %s110 = sphi 0, %s110
      %s112 = sphi 0, %s110
      %s113 = sphi 0, %s112
      %s127 = sphi 0, %s113
      %s131 = sphi 0, %s131
      %s133 = sphi 0, %s131
      %s134 = sphi 0, %s133
      %s148 = sphi 0, %s134
      %s152 = sphi 0, %s152
      %s154 = sphi 0, %s152
      %s155 = sphi 0, %s154
      %s169 = sphi 0, %s155
    $region4: #{tpu_custom_call.1} parent=1 // loop_header_branch
      %16 = sbr.rel (%p14) target = $region8
    $region5: #{tpu_custom_call.1} parent=1 // loop_body
      %s18 = ssub.s32 %s13, 1
      %s19 = ssub.s32 %s13, 2
      %s20 = sadd.s32 %s13, 1
      %s21 = ssub.s32 %s13, %s20
      %p22 = scmp.eq.s32.totalorder %s21, 0
      %s24 = sadd.s32 %s23, 1
      %s25 = scalar_select %p22, %s23, %s24
      %p28 = pneg %p22
      %p29 = scmp.eq.s32.totalorder %s13, 1
      %p30 = por %p28, %p29
      %p31 = scmp.ne.s32.totalorder %s23, %s26
      %p32 = scmp.eq.s32.totalorder %s13, 0
      %p33 = por %p31, %p32
      %p34 = scmp.ne.s32.totalorder %s23, %s26
      %p35 = scmp.eq.s32.totalorder %s18, 1
      %p36 = por %p34, %p35
      %p37 = scmp.ne.s32.totalorder %s26, %s27
      %p38 = scmp.eq.s32.totalorder %s18, 0
      %p39 = por %p37, %p38
      %p40 = scmp.ne.s32.totalorder %s26, %s27
      %p41 = scmp.eq.s32.totalorder %s19, 1
      %p42 = por %p40, %p41
      %p44 = scmp.ne.s32.totalorder %s27, %s43
      %p45 = scmp.eq.s32.totalorder %s19, 0
      %p46 = por %p44, %p45
      %s48 = sadd.s32 %s47, 1
      %p51 = scmp.eq.s32.totalorder %s13, 1
      %p52 = scmp.ne.s32.totalorder %s47, %s49
      %p53 = scmp.eq.s32.totalorder %s13, 0
      %p54 = por %p52, %p53
      %p55 = scmp.ne.s32.totalorder %s47, %s49
      %p56 = scmp.eq.s32.totalorder %s18, 1
      %p57 = por %p55, %p56
      %p58 = scmp.ne.s32.totalorder %s49, %s50
      %p59 = scmp.eq.s32.totalorder %s18, 0
      %p60 = por %p58, %p59
      %p61 = scmp.ne.s32.totalorder %s49, %s50
      %p62 = scmp.eq.s32.totalorder %s19, 1
      %p63 = por %p61, %p62
      %p65 = scmp.ne.s32.totalorder %s50, %s64
      %p66 = scmp.eq.s32.totalorder %s19, 0
      %p67 = por %p65, %p66
      %s69 = sadd.s32 %s68, 1
      %p72 = scmp.eq.s32.totalorder %s13, 1
      %p73 = scmp.ne.s32.totalorder %s68, %s70
      %p74 = scmp.eq.s32.totalorder %s13, 0
      %p75 = por %p73, %p74
      %p76 = scmp.ne.s32.totalorder %s68, %s70
      %p77 = scmp.eq.s32.totalorder %s18, 1
      %p78 = por %p76, %p77
      %p79 = scmp.ne.s32.totalorder %s70, %s71
      %p80 = scmp.eq.s32.totalorder %s18, 0
      %p81 = por %p79, %p80
      %p82 = scmp.ne.s32.totalorder %s70, %s71
      %p83 = scmp.eq.s32.totalorder %s19, 1
      %p84 = por %p82, %p83
      %p86 = scmp.ne.s32.totalorder %s71, %s85
      %p87 = scmp.eq.s32.totalorder %s19, 0
      %p88 = por %p86, %p87
      %s90 = sadd.s32 %s89, 1
      %p93 = scmp.eq.s32.totalorder %s13, 1
      %p94 = scmp.ne.s32.totalorder %s89, %s91
      %p95 = scmp.eq.s32.totalorder %s13, 0
      %p96 = por %p94, %p95
      %p97 = scmp.ne.s32.totalorder %s89, %s91
      %p98 = scmp.eq.s32.totalorder %s18, 1
      %p99 = por %p97, %p98
      %p100 = scmp.ne.s32.totalorder %s91, %s92
      %p101 = scmp.eq.s32.totalorder %s18, 0
      %p102 = por %p100, %p101
      %p103 = scmp.ne.s32.totalorder %s91, %s92
      %p104 = scmp.eq.s32.totalorder %s19, 1
      %p105 = por %p103, %p104
      %p107 = scmp.ne.s32.totalorder %s92, %s106
      %p108 = scmp.eq.s32.totalorder %s19, 0
      %p109 = por %p107, %p108
      %s111 = sadd.s32 %s110, 1
      %p114 = scmp.eq.s32.totalorder %s13, 1
      %p115 = scmp.ne.s32.totalorder %s110, %s112
      %p116 = scmp.eq.s32.totalorder %s13, 0
      %p117 = por %p115, %p116
      %p118 = scmp.ne.s32.totalorder %s110, %s112
      %p119 = scmp.eq.s32.totalorder %s18, 1
      %p120 = por %p118, %p119
      %p121 = scmp.ne.s32.totalorder %s112, %s113
      %p122 = scmp.eq.s32.totalorder %s18, 0
      %p123 = por %p121, %p122
      %p124 = scmp.ne.s32.totalorder %s112, %s113
      %p125 = scmp.eq.s32.totalorder %s19, 1
      %p126 = por %p124, %p125
      %p128 = scmp.ne.s32.totalorder %s113, %s127
      %p129 = scmp.eq.s32.totalorder %s19, 0
      %p130 = por %p128, %p129
      %s132 = sadd.s32 %s131, 1
      %p135 = scmp.eq.s32.totalorder %s13, 1
      %p136 = scmp.ne.s32.totalorder %s131, %s133
      %p137 = scmp.eq.s32.totalorder %s13, 0
      %p138 = por %p136, %p137
      %p139 = scmp.ne.s32.totalorder %s131, %s133
      %p140 = scmp.eq.s32.totalorder %s18, 1
      %p141 = por %p139, %p140
      %p142 = scmp.ne.s32.totalorder %s133, %s134
      %p143 = scmp.eq.s32.totalorder %s18, 0
      %p144 = por %p142, %p143
      %p145 = scmp.ne.s32.totalorder %s133, %s134
      %p146 = scmp.eq.s32.totalorder %s19, 1
      %p147 = por %p145, %p146
      %p149 = scmp.ne.s32.totalorder %s134, %s148
      %p150 = scmp.eq.s32.totalorder %s19, 0
      %p151 = por %p149, %p150
      %s153 = sadd.s32 %s152, 1
      %p156 = scmp.eq.s32.totalorder %s13, 1
      %p157 = scmp.ne.s32.totalorder %s152, %s154
      %p158 = scmp.eq.s32.totalorder %s13, 0
      %p159 = por %p157, %p158
      %p160 = scmp.ne.s32.totalorder %s152, %s154
      %p161 = scmp.eq.s32.totalorder %s18, 1
      %p162 = por %p160, %p161
      %p163 = scmp.ne.s32.totalorder %s154, %s155
      %p164 = scmp.eq.s32.totalorder %s18, 0
      %p165 = por %p163, %p164
      %p166 = scmp.ne.s32.totalorder %s154, %s155
      %p167 = scmp.eq.s32.totalorder %s19, 1
      %p168 = por %p166, %p167
      %p170 = scmp.ne.s32.totalorder %s155, %s169
      %p171 = scmp.eq.s32.totalorder %s19, 0
      %p172 = por %p170, %p171
      %p173 = scmp.le.s32.totalorder 1, %s13
      %p174 = scmp.lt.s32.totalorder %s13, 3
      %p175 = pnand %p173, %p174
      %p176 = pneg %p175
      // Predicated region
      $region9: #{tpu_custom_call.1} parent=5 // pred_check
        _
      $region10: #{tpu_custom_call.1} parent=5 // pred_check_branch
        %178 = sbr.rel (%p175) target = $region12
      $region11: #{tpu_custom_call.1} parent=5 // pred_region
        %s179 = ssub.s32 %s13, 1
        // Predicated region
        $region13: #{tpu_custom_call.1} parent=11 // pred_check
          %p180 = pneg %p60
        $region14: #{tpu_custom_call.1} parent=11 // pred_check_branch
          %182 = sbr.rel (%p180) target = $region16
        $region15: #{tpu_custom_call.1} parent=11 // pred_region
          _
        $region16: #{tpu_custom_call.1} parent=11 // pred_fallthru
          _
        // Predicated region
        $region17: #{tpu_custom_call.1} parent=11 // pred_check
          %p183 = pneg %p81
        $region18: #{tpu_custom_call.1} parent=11 // pred_check_branch
          %185 = sbr.rel (%p183) target = $region20
        $region19: #{tpu_custom_call.1} parent=11 // pred_region
          _
        $region20: #{tpu_custom_call.1} parent=11 // pred_fallthru
          _
        // Predicated region
        $region21: #{tpu_custom_call.1} parent=11 // pred_check
          %p186 = pneg %p102
        $region22: #{tpu_custom_call.1} parent=11 // pred_check_branch
          %188 = sbr.rel (%p186) target = $region24
        $region23: #{tpu_custom_call.1} parent=11 // pred_region
          _
        $region24: #{tpu_custom_call.1} parent=11 // pred_fallthru
          _
        // Predicated region
        $region25: #{tpu_custom_call.1} parent=11 // pred_check
          %p189 = pneg %p123
        $region26: #{tpu_custom_call.1} parent=11 // pred_check_branch
          %191 = sbr.rel (%p189) target = $region28
        $region27: #{tpu_custom_call.1} parent=11 // pred_region
          _
        $region28: #{tpu_custom_call.1} parent=11 // pred_fallthru
          _
        // Predicated region
        $region29: #{tpu_custom_call.1} parent=11 // pred_check
          %p192 = pneg %p144
        $region30: #{tpu_custom_call.1} parent=11 // pred_check_branch
          %194 = sbr.rel (%p192) target = $region32
        $region31: #{tpu_custom_call.1} parent=11 // pred_region
          _
        $region32: #{tpu_custom_call.1} parent=11 // pred_fallthru
          _
      $region12: #{tpu_custom_call.1} parent=5 // pred_fallthru
        _
      %p195 = scmp.lt.s32.totalorder %s13, 2
      // Predicated region
      $region33: #{tpu_custom_call.1} parent=5 // pred_check
        %p196 = pneg %p195
      $region34: #{tpu_custom_call.1} parent=5 // pred_check_branch
        %198 = sbr.rel (%p196) target = $region36
      $region35: #{tpu_custom_call.1} parent=5 // pred_region
        // Predicated region
        $region37: #{tpu_custom_call.1} parent=35 // pred_check
          %p199 = pneg %p33
        $region38: #{tpu_custom_call.1} parent=35 // pred_check_branch
          %201 = sbr.rel (%p199) target = $region40
        $region39: #{tpu_custom_call.1} parent=35 // pred_region
          %p202 = scmp.lt.s32.totalorder %s13, 1
          %s203 = scalar_select %p202, %s13, 1
          %s204 = smul.addr %s203, 3
          %s205 = smul.addr %s204, 4
          %s206 = scalar_lea.vmem %s0, %s205
        $region40: #{tpu_custom_call.1} parent=35 // pred_fallthru
          _
      $region36: #{tpu_custom_call.1} parent=5 // pred_fallthru
        _
      %p207 = scmp.le.s32.totalorder 1, %s13
      %p208 = scmp.lt.s32.totalorder %s13, 3
      %p209 = pnand %p207, %p208
      %p210 = pneg %p209
      // Predicated region
      $region41: #{tpu_custom_call.1} parent=5 // pred_check
        _
      $region42: #{tpu_custom_call.1} parent=5 // pred_check_branch
        %212 = sbr.rel (%p209) target = $region44
      $region43: #{tpu_custom_call.1} parent=5 // pred_region
        %s213 = ssub.s32 %s13, 1
        %p214 = scmp.lt.s32.totalorder %s18, 1
        %s215 = scalar_select %p214, %s18, 1
        %s216 = smul.addr %s215, 3
        %s217 = smul.addr %s216, 4
        %s218 = scalar_lea.vmem %s0, %s217
        %p219 = pneg %p39
        %p220 = pneg %p36
        %p221 = pneg %p60
        %p222 = pneg %p57
        %p223 = pneg %p81
        %p224 = pneg %p78
        %p225 = pneg %p102
        %p226 = pneg %p99
        %p227 = pneg %p123
        %p228 = pneg %p120
        %p229 = pneg %p144
        %p230 = pneg %p141
        %p231 = pneg %p165
        %p232 = pneg %p162
        %p233 = scmp.lt.s32.totalorder %s18, 1
        %s234 = scalar_select %p233, %s18, 1
        %s235 = smul.addr %s234, 3
        %s236 = smul.addr %s235, 4
        %s237 = scalar_lea.vmem %s0, %s236
        %v239 = vld [vmem:[%s237] sm:$0xf]
        %v240 = vld [vmem:[%s237 + $0x4] sm:$0xf]
        %v241 = vld [vmem:[%s1] sm:$0xf]
        %v242 = vld [vmem:[%s1 + $0x4] sm:$0xf]
        %v243 = vld [vmem:[%s1 + $0x8] sm:$0xf]
        %v244 = vld [vmem:[%s1 + $0xc] sm:$0xf]
        %v245 = vld [vmem:[%s1 + $0x10] sm:$0xf]
        %v246 = vld [vmem:[%s1 + $0x14] sm:$0xf]
        %v247 = vld [vmem:[%s1 + $0x18] sm:$0xf]
        %v248 = vld [vmem:[%s1 + $0x1c] sm:$0xf]
        %v249 = vld [vmem:[%s1 + $0x20] sm:$0xf]
        %v250 = vld [vmem:[%s237 + $0x8] sm:$0x1]
        %s251 = scalar_lea.vmem %s1, 36
        %v252 = vld [vmem:[%s251] sm:$0xf]
        %v253 = vld [vmem:[%s251 + $0x4] sm:$0xf]
        %v254 = vld [vmem:[%s251 + $0x8] sm:$0xf]
        %v255 = vld [vmem:[%s251 + $0xc] sm:$0xf]
        %v256 = vld [vmem:[%s251 + $0x10] sm:$0xf]
        %v257 = vld [vmem:[%s251 + $0x14] sm:$0xf]
        %v258 = vld [vmem:[%s251 + $0x18] sm:$0xf]
        %v259 = vld [vmem:[%s251 + $0x1c] sm:$0xf]
        %v260 = vld [vmem:[%s251 + $0x20] sm:$0xf]
        %v264 = vunpack.c.l.b16 %v239
        %v265 = vunpack.c.l.b16 %v240
        %v266 = vunpack.c.l.b16 %v250
        %v267 = vpack.c.b16 %v265, %v264
        %v268 = vpack.c.b16 %v266, %v266
        %vm269 = vsmask.f32 7424
        %v271 = vshrl.u32 %v267, 16
        %v273 = vshll.u32 %v267, 16
        %v275 = vrot.slane %v273, 1
        %v276 = vor.u32 %v271, %v275
        %v278 = vshll.u32 %v268, 16
        %v280 = vrot.slane %v278, 1
        %v281 = vsel %vm269, %v276, %v280
        %v291 = vunpack.c.l.b16 %v252
        %v292 = vunpack.c.l.b16 %v253
        %v293 = vunpack.c.l.b16 %v254
        %v294 = vunpack.c.l.b16 %v255
        %v295 = vunpack.c.l.b16 %v256
        %v296 = vunpack.c.l.b16 %v257
        %v297 = vunpack.c.l.b16 %v258
        %v298 = vunpack.c.l.b16 %v259
        %v299 = vunpack.c.l.b16 %v260
        %v300 = vpack.c.b16 %v292, %v291
        %v301 = vpack.c.b16 %v294, %v293
        %v302 = vpack.c.b16 %v296, %v295
        %v303 = vpack.c.b16 %v298, %v297
        %v304 = vpack.c.b16 %v299, %v299
        %vm309 = vcmask 588800
        %v311 = vsel %vm309, %v281, 0
        %vm313 = vcmask 1043456
        %v315 = vsel %vm313, %v304, 0
        %317 = vmatprep.subr.bf16.mxu0 0
        %318 = vmatpush1.bf16.msra.mxu0 %v300
        %319 = vmatprep.subr.bf16.mxu0 0
        %320 = vmatpush1.bf16.msra.mxu0 %v301
        %321 = vmatprep.subr.bf16.mxu0 0
        %322 = vmatpush1.bf16.msra.mxu0 %v302
        %323 = vmatprep.subr.bf16.mxu0 0
        %324 = vmatpush1.bf16.msra.mxu0 %v303
        %325 = vmatprep.subr.bf16.mxu0 0
        %326 = vmatpush1.bf16.msra.mxu0 %v315
        %327 = vmatprep.subr.bf16.mxu0 0
        %328 = vmatpush1.bf16.msra.mxu0 0
        %329 = vmatprep.subr.bf16.mxu0 0
        %330 = vmatpush1.bf16.msra.mxu0 0
        %331 = vmatprep.subr.bf16.mxu0 0
        %332 = vmatpush1.bf16.msra.mxu0 0
        %333 = vmatprep.subr.bf16.mxu0 0
        %334 = vmatpush1.bf16.msra.mxu0 0
        %335 = vmatprep.subr.bf16.mxu0 0
        %336 = vmatpush1.bf16.msra.mxu0 0
        %337 = vmatprep.subr.bf16.mxu0 0
        %338 = vmatpush1.bf16.msra.mxu0 0
        %339 = vmatprep.subr.bf16.mxu0 0
        %340 = vmatpush1.bf16.msra.mxu0 0
        %341 = vmatprep.subr.bf16.mxu0 0
        %342 = vmatpush1.bf16.msra.mxu0 0
        %343 = vmatprep.subr.bf16.mxu0 0
        %344 = vmatpush1.bf16.msra.mxu0 0
        %345 = vmatprep.subr.bf16.mxu0 0
        %346 = vmatpush1.bf16.msra.mxu0 0
        %347 = vmatprep.subr.bf16.mxu0 0
        %348 = vmatpush1.bf16.msra.mxu0 0
        %349 = vmatprep.mubr.bf16.mxu0 0
        %350 = vmatmul.mubr.bf16.gmra.mrb[0].mxu0 %v311
        %v351 = vpop.f32.mrb[0].mxu0
        %v352 = vadd.f32 0.0, %v351
        %v353 = vpop.f32.mrb[0].mxu0
        %v354 = vpop.f32.mrb[0].mxu0
        %v355 = vadd.f32 0.0, %v354
        %v356 = vpop.f32.mrb[0].mxu0
        %357 = vdwg.mxu0
        %v367 = vunpack.c.l.b16 %v241
        %v368 = vunpack.c.l.b16 %v242
        %v369 = vunpack.c.l.b16 %v243
        %v370 = vunpack.c.l.b16 %v244
        %v371 = vunpack.c.l.b16 %v245
        %v372 = vunpack.c.l.b16 %v246
        %v373 = vunpack.c.l.b16 %v247
        %v374 = vunpack.c.l.b16 %v248
        %v375 = vunpack.c.l.b16 %v249
        %v376 = vpack.c.b16 %v368, %v367
        %v377 = vpack.c.b16 %v370, %v369
        %v378 = vpack.c.b16 %v372, %v371
        %v379 = vpack.c.b16 %v374, %v373
        %v380 = vpack.c.b16 %v375, %v375
        %v385 = vsel %vm309, %v267, 0
        %v388 = vsel %vm313, %v380, 0
        %390 = vmatprep.subr.bf16.mxu0 0
        %391 = vmatpush1.bf16.msra.mxu0 %v376
        %392 = vmatprep.subr.bf16.mxu0 0
        %393 = vmatpush1.bf16.msra.mxu0 %v377
        %394 = vmatprep.subr.bf16.mxu0 0
        %395 = vmatpush1.bf16.msra.mxu0 %v378
        %396 = vmatprep.subr.bf16.mxu0 0
        %397 = vmatpush1.bf16.msra.mxu0 %v379
        %398 = vmatprep.subr.bf16.mxu0 0
        %399 = vmatpush1.bf16.msra.mxu0 %v388
        %400 = vmatprep.subr.bf16.mxu0 0
        %401 = vmatpush1.bf16.msra.mxu0 0
        %402 = vmatprep.subr.bf16.mxu0 0
        %403 = vmatpush1.bf16.msra.mxu0 0
        %404 = vmatprep.subr.bf16.mxu0 0
        %405 = vmatpush1.bf16.msra.mxu0 0
        %406 = vmatprep.subr.bf16.mxu0 0
        %407 = vmatpush1.bf16.msra.mxu0 0
        %408 = vmatprep.subr.bf16.mxu0 0
        %409 = vmatpush1.bf16.msra.mxu0 0
        %410 = vmatprep.subr.bf16.mxu0 0
        %411 = vmatpush1.bf16.msra.mxu0 0
        %412 = vmatprep.subr.bf16.mxu0 0
        %413 = vmatpush1.bf16.msra.mxu0 0
        %414 = vmatprep.subr.bf16.mxu0 0
        %415 = vmatpush1.bf16.msra.mxu0 0
        %416 = vmatprep.subr.bf16.mxu0 0
        %417 = vmatpush1.bf16.msra.mxu0 0
        %418 = vmatprep.subr.bf16.mxu0 0
        %419 = vmatpush1.bf16.msra.mxu0 0
        %420 = vmatprep.subr.bf16.mxu0 0
        %421 = vmatpush1.bf16.msra.mxu0 0
        %422 = vmatprep.mubr.bf16.mxu0 0
        %423 = vmatmul.mubr.bf16.gmra.mrb[0].mxu0 %v385
        %v424 = vpop.f32.mrb[0].mxu0
        %v425 = vadd.f32 %v352, %v424
        %v426 = vpop.f32.mrb[0].mxu0
        %v427 = vpop.f32.mrb[0].mxu0
        %v428 = vadd.f32 %v355, %v427
        %v429 = vpop.f32.mrb[0].mxu0
        %430 = vdwg.mxu0
        %v431 = vld [vmem:[%s237] sm:$0xe]
        %s432 = scalar_lea.vmem %s1, 72
        %v433 = vld [vmem:[%s432] sm:$0xf]
        %v434 = vld [vmem:[%s432 + $0x4] sm:$0xf]
        %v435 = vld [vmem:[%s432 + $0x8] sm:$0xf]
        %v436 = vld [vmem:[%s432 + $0xc] sm:$0xf]
        %v437 = vld [vmem:[%s432 + $0x10] sm:$0xf]
        %v438 = vld [vmem:[%s432 + $0x14] sm:$0xf]
        %v439 = vld [vmem:[%s432 + $0x18] sm:$0xf]
        %v440 = vld [vmem:[%s432 + $0x1c] sm:$0xf]
        %v441 = vld [vmem:[%s432 + $0x20] sm:$0xf]
        %v443 = vunpack.c.l.b16 %v431
        %v444 = vpack.c.b16 %v265, %v443
        %vm445 = vcmask 1046528
        %v446 = vrot.slane %v444, 1
        %v447 = vrot.slane %v268, 1
        %v448 = vsel %vm445, %v446, %v447
        %v458 = vunpack.c.l.b16 %v433
        %v459 = vunpack.c.l.b16 %v434
        %v460 = vunpack.c.l.b16 %v435
        %v461 = vunpack.c.l.b16 %v436
        %v462 = vunpack.c.l.b16 %v437
        %v463 = vunpack.c.l.b16 %v438
        %v464 = vunpack.c.l.b16 %v439
        %v465 = vunpack.c.l.b16 %v440
        %v466 = vunpack.c.l.b16 %v441
        %v467 = vpack.c.b16 %v459, %v458
        %v468 = vpack.c.b16 %v461, %v460
        %v469 = vpack.c.b16 %v463, %v462
        %v470 = vpack.c.b16 %v465, %v464
        %v471 = vpack.c.b16 %v466, %v466
        %v477 = vsel %vm309, %v448, 0
        %v480 = vsel %vm313, %v471, 0
        %482 = vmatprep.subr.bf16.mxu0 0
        %483 = vmatpush1.bf16.msra.mxu0 %v467
        %484 = vmatprep.subr.bf16.mxu0 0
        %485 = vmatpush1.bf16.msra.mxu0 %v468
        %486 = vmatprep.subr.bf16.mxu0 0
        %487 = vmatpush1.bf16.msra.mxu0 %v469
        %488 = vmatprep.subr.bf16.mxu0 0
        %489 = vmatpush1.bf16.msra.mxu0 %v470
        %490 = vmatprep.subr.bf16.mxu0 0
        %491 = vmatpush1.bf16.msra.mxu0 %v480
        %492 = vmatprep.subr.bf16.mxu0 0
        %493 = vmatpush1.bf16.msra.mxu0 0
        %494 = vmatprep.subr.bf16.mxu0 0
        %495 = vmatpush1.bf16.msra.mxu0 0
        %496 = vmatprep.subr.bf16.mxu0 0
        %497 = vmatpush1.bf16.msra.mxu0 0
        %498 = vmatprep.subr.bf16.mxu0 0
        %499 = vmatpush1.bf16.msra.mxu0 0
        %500 = vmatprep.subr.bf16.mxu0 0
        %501 = vmatpush1.bf16.msra.mxu0 0
        %502 = vmatprep.subr.bf16.mxu0 0
        %503 = vmatpush1.bf16.msra.mxu0 0
        %504 = vmatprep.subr.bf16.mxu0 0
        %505 = vmatpush1.bf16.msra.mxu0 0
        %506 = vmatprep.subr.bf16.mxu0 0
        %507 = vmatpush1.bf16.msra.mxu0 0
        %508 = vmatprep.subr.bf16.mxu0 0
        %509 = vmatpush1.bf16.msra.mxu0 0
        %510 = vmatprep.subr.bf16.mxu0 0
        %511 = vmatpush1.bf16.msra.mxu0 0
        %512 = vmatprep.subr.bf16.mxu0 0
        %513 = vmatpush1.bf16.msra.mxu0 0
        %514 = vmatprep.mubr.bf16.mxu0 0
        %515 = vmatmul.mubr.bf16.gmra.mrb[0].mxu0 %v477
        %v516 = vpop.f32.mrb[0].mxu0
        %v517 = vadd.f32 0.0, %v516
        %v518 = vpop.f32.mrb[0].mxu0
        %v519 = vpop.f32.mrb[0].mxu0
        %v520 = vadd.f32 0.0, %v519
        %v521 = vpop.f32.mrb[0].mxu0
        %522 = vdwg.mxu0
        %v523 = vadd.f32 %v425, %v517
        %v524 = vadd.f32 %v428, %v520
        %s525 = smul.u32 %s18, 16
        %s526 = scalar_lea.vmem [#allocation2], %s525
        %527 = vst [vmem:[%s526] sm:$0xff] %v523
        %528 = vst [vmem:[%s526 + $0x8] sm:$0xff] %v524
        %p529 = scmp.eq.s32.totalorder %s18, 1
        // Predicated region
        $region45: #{tpu_custom_call.1} parent=43 // pred_check
          %p530 = pneg %p529
        $region46: #{tpu_custom_call.1} parent=43 // pred_check_branch
          %532 = sbr.rel (%p530) target = $region48
        $region47: #{tpu_custom_call.1} parent=43 // pred_region
          %v533 = vld [vmem:[#allocation2] sm:$0xff]
          %v534 = vld [vmem:[#allocation2 + $0x8] sm:$0xff]
          %v535 = vld [vmem:[#allocation2 + $0x10] sm:$0xff]
          %v536 = vld [vmem:[#allocation2 + $0x18] sm:$0xff]
          %vm537 = vcmask 261120
          %v539 = vsel %vm537, 1.0, 0
          %541 = vmatprep.subr.mxu0 0.0
          %542 = vmatpush1.msra.mxu0 %v533
          %543 = vmatprep.subr.mxu0 0.0
          %544 = vmatpush1.msra.mxu0 %v534
          %545 = vmatprep.subr.mxu0 0.0
          %546 = vmatpush1.msra.mxu0 %v535
          %547 = vmatprep.subr.mxu0 0.0
          %548 = vmatpush1.msra.mxu0 %v536
          %549 = vmatprep.subr.mxu0 0.0
          %550 = vmatpush1.msra.mxu0 0.0
          %551 = vmatprep.subr.mxu0 0.0
          %552 = vmatpush1.msra.mxu0 0.0
          %553 = vmatprep.subr.mxu0 0.0
          %554 = vmatpush1.msra.mxu0 0.0
          %555 = vmatprep.subr.mxu0 0.0
          %556 = vmatpush1.msra.mxu0 0.0
          %557 = vmatprep.subr.mxu0 0.0
          %558 = vmatpush1.msra.mxu0 0.0
          %559 = vmatprep.subr.mxu0 0.0
          %560 = vmatpush1.msra.mxu0 0.0
          %561 = vmatprep.subr.mxu0 0.0
          %562 = vmatpush1.msra.mxu0 0.0
          %563 = vmatprep.subr.mxu0 0.0
          %564 = vmatpush1.msra.mxu0 0.0
          %565 = vmatprep.subr.mxu0 0.0
          %566 = vmatpush1.msra.mxu0 0.0
          %567 = vmatprep.subr.mxu0 0.0
          %568 = vmatpush1.msra.mxu0 0.0
          %569 = vmatprep.subr.mxu0 0.0
          %570 = vmatpush1.msra.mxu0 0.0
          %571 = vmatprep.subr.mxu0 0.0
          %572 = vmatpush1.msra.mxu0 0.0
          %573 = vmatprep.subr.mxu0 0.0
          %574 = vmatpush1.msra.mxu0 0.0
          %575 = vmatprep.subr.mxu0 0.0
          %576 = vmatpush1.msra.mxu0 0.0
          %577 = vmatprep.subr.mxu0 0.0
          %578 = vmatpush1.msra.mxu0 0.0
          %579 = vmatprep.subr.mxu0 0.0
          %580 = vmatpush1.msra.mxu0 0.0
          %581 = vmatprep.subr.mxu0 0.0
          %582 = vmatpush1.msra.mxu0 0.0
          %583 = vmatprep.subr.mxu0 0.0
          %584 = vmatpush1.msra.mxu0 0.0
          %585 = vmatprep.subr.mxu0 0.0
          %586 = vmatpush1.msra.mxu0 0.0
          %587 = vmatprep.subr.mxu0 0.0
          %588 = vmatpush1.msra.mxu0 0.0
          %589 = vmatprep.subr.mxu0 0.0
          %590 = vmatpush1.msra.mxu0 0.0
          %591 = vmatprep.subr.mxu0 0.0
          %592 = vmatpush1.msra.mxu0 0.0
          %593 = vmatprep.subr.mxu0 0.0
          %594 = vmatpush1.msra.mxu0 0.0
          %595 = vmatprep.subr.mxu0 0.0
          %596 = vmatpush1.msra.mxu0 0.0
          %597 = vmatprep.subr.mxu0 0.0
          %598 = vmatpush1.msra.mxu0 0.0
          %599 = vmatprep.subr.mxu0 0.0
          %600 = vmatpush1.msra.mxu0 0.0
          %601 = vmatprep.subr.mxu0 0.0
          %602 = vmatpush1.msra.mxu0 0.0
          %603 = vmatprep.subr.mxu0 0.0
          %604 = vmatpush1.msra.mxu0 0.0
          %605 = vmatprep.mubr.f32.mxu0 0.0
          %606 = vmatmul.mubr.f32.gmra.mrb[0].mxu0 %v539
          %v607 = vpop.f32.mrb[0].mxu0
          %v608 = vadd.f32 0.0, %v607
          %v609 = vpop.f32.mrb[0].mxu0
          %610 = vdwg.mxu0
          %v611 = vld [vmem:[%s2] sm:$0xff]
          %v612 = vld [vmem:[%s2 + $0x8] sm:$0xff]
          %v613 = vld [vmem:[%s2 + $0x10] sm:$0xff]
          %v614 = vld [vmem:[%s2 + $0x18] sm:$0xff]
          %v615 = vld [vmem:[%s2 + $0x20] sm:$0xff]
          %v616 = vld [vmem:[%s2 + $0x28] sm:$0xff]
          %v617 = vld [vmem:[%s2 + $0x30] sm:$0xff]
          %v618 = vld [vmem:[%s2 + $0x38] sm:$0xff]
          %v619 = vld [vmem:[%s2 + $0x40] sm:$0xff]
          %v620 = vld [vmem:[%s2 + $0x48] sm:$0xff]
          %v621 = vld [vmem:[%s2 + $0x50] sm:$0xff]
          %v622 = vld [vmem:[%s2 + $0x58] sm:$0xff]
          %v623 = vld [vmem:[%s2 + $0x60] sm:$0xff]
          %v624 = vld [vmem:[%s2 + $0x68] sm:$0xff]
          %v625 = vld [vmem:[%s2 + $0x70] sm:$0xff]
          %v626 = vld [vmem:[%s2 + $0x78] sm:$0xff]
          %627 = vmatprep.subr.mxu0 0.0
          %628 = vmatpush1.msra.mxu0 %v611
          %629 = vmatprep.subr.mxu0 0.0
          %630 = vmatpush1.msra.mxu0 %v612
          %631 = vmatprep.subr.mxu0 0.0
          %632 = vmatpush1.msra.mxu0 %v613
          %633 = vmatprep.subr.mxu0 0.0
          %634 = vmatpush1.msra.mxu0 %v614
          %635 = vmatprep.subr.mxu0 0.0
          %636 = vmatpush1.msra.mxu0 %v615
          %637 = vmatprep.subr.mxu0 0.0
          %638 = vmatpush1.msra.mxu0 %v616
          %639 = vmatprep.subr.mxu0 0.0
          %640 = vmatpush1.msra.mxu0 %v617
          %641 = vmatprep.subr.mxu0 0.0
          %642 = vmatpush1.msra.mxu0 %v618
          %643 = vmatprep.subr.mxu0 0.0
          %644 = vmatpush1.msra.mxu0 %v619
          %645 = vmatprep.subr.mxu0 0.0
          %646 = vmatpush1.msra.mxu0 %v620
          %647 = vmatprep.subr.mxu0 0.0
          %648 = vmatpush1.msra.mxu0 %v621
          %649 = vmatprep.subr.mxu0 0.0
          %650 = vmatpush1.msra.mxu0 %v622
          %651 = vmatprep.subr.mxu0 0.0
          %652 = vmatpush1.msra.mxu0 %v623
          %653 = vmatprep.subr.mxu0 0.0
          %654 = vmatpush1.msra.mxu0 %v624
          %655 = vmatprep.subr.mxu0 0.0
          %656 = vmatpush1.msra.mxu0 %v625
          %657 = vmatprep.subr.mxu0 0.0
          %658 = vmatpush1.msra.mxu0 %v626
          %659 = vmatprep.subr.mxu0 0.0
          %660 = vmatpush1.msra.mxu0 0.0
          %661 = vmatprep.subr.mxu0 0.0
          %662 = vmatpush1.msra.mxu0 0.0
          %663 = vmatprep.subr.mxu0 0.0
          %664 = vmatpush1.msra.mxu0 0.0
          %665 = vmatprep.subr.mxu0 0.0
          %666 = vmatpush1.msra.mxu0 0.0
          %667 = vmatprep.subr.mxu0 0.0
          %668 = vmatpush1.msra.mxu0 0.0
          %669 = vmatprep.subr.mxu0 0.0
          %670 = vmatpush1.msra.mxu0 0.0
          %671 = vmatprep.subr.mxu0 0.0
          %672 = vmatpush1.msra.mxu0 0.0
          %673 = vmatprep.subr.mxu0 0.0
          %674 = vmatpush1.msra.mxu0 0.0
          %675 = vmatprep.subr.mxu0 0.0
          %676 = vmatpush1.msra.mxu0 0.0
          %677 = vmatprep.subr.mxu0 0.0
          %678 = vmatpush1.msra.mxu0 0.0
          %679 = vmatprep.subr.mxu0 0.0
          %680 = vmatpush1.msra.mxu0 0.0
          %681 = vmatprep.subr.mxu0 0.0
          %682 = vmatpush1.msra.mxu0 0.0
          %683 = vmatprep.subr.mxu0 0.0
          %684 = vmatpush1.msra.mxu0 0.0
          %685 = vmatprep.subr.mxu0 0.0
          %686 = vmatpush1.msra.mxu0 0.0
          %687 = vmatprep.subr.mxu0 0.0
          %688 = vmatpush1.msra.mxu0 0.0
          %689 = vmatprep.subr.mxu0 0.0
          %690 = vmatpush1.msra.mxu0 0.0
          %691 = vmatprep.mubr.f32.mxu0 0.0
          %692 = vmatmul.mubr.f32.gmra.mrb[0].mxu0 %v608
          %v693 = vpop.f32.mrb[0].mxu0
          %v694 = vadd.f32 0.0, %v693
          %v695 = vpop.f32.mrb[0].mxu0
          %696 = vdwg.mxu0
          %v697 = vmul.f32 %v694, 0.001953125
          %v698 = vld [vmem:[%s3] sm:$0xff]
          %vm699 = vcmask 64512
          %v701 = vsel %vm699, %v697, 0
          %703 = vmatprep.subr.mxu0 0.0
          %704 = vmatpush1.msra.mxu0 %v698
          %705 = vmatprep.subr.mxu0 0.0
          %706 = vmatpush1.msra.mxu0 0.0
          %707 = vmatprep.subr.mxu0 0.0
          %708 = vmatpush1.msra.mxu0 0.0
          %709 = vmatprep.subr.mxu0 0.0
          %710 = vmatpush1.msra.mxu0 0.0
          %711 = vmatprep.subr.mxu0 0.0
          %712 = vmatpush1.msra.mxu0 0.0
          %713 = vmatprep.subr.mxu0 0.0
          %714 = vmatpush1.msra.mxu0 0.0
          %715 = vmatprep.subr.mxu0 0.0
          %716 = vmatpush1.msra.mxu0 0.0
          %717 = vmatprep.subr.mxu0 0.0
          %718 = vmatpush1.msra.mxu0 0.0
          %719 = vmatprep.subr.mxu0 0.0
          %720 = vmatpush1.msra.mxu0 0.0
          %721 = vmatprep.subr.mxu0 0.0
          %722 = vmatpush1.msra.mxu0 0.0
          %723 = vmatprep.subr.mxu0 0.0
          %724 = vmatpush1.msra.mxu0 0.0
          %725 = vmatprep.subr.mxu0 0.0
          %726 = vmatpush1.msra.mxu0 0.0
          %727 = vmatprep.subr.mxu0 0.0
          %728 = vmatpush1.msra.mxu0 0.0
          %729 = vmatprep.subr.mxu0 0.0
          %730 = vmatpush1.msra.mxu0 0.0
          %731 = vmatprep.subr.mxu0 0.0
          %732 = vmatpush1.msra.mxu0 0.0
          %733 = vmatprep.subr.mxu0 0.0
          %734 = vmatpush1.msra.mxu0 0.0
          %735 = vmatprep.subr.mxu0 0.0
          %736 = vmatpush1.msra.mxu0 0.0
          %737 = vmatprep.subr.mxu0 0.0
          %738 = vmatpush1.msra.mxu0 0.0
          %739 = vmatprep.subr.mxu0 0.0
          %740 = vmatpush1.msra.mxu0 0.0
          %741 = vmatprep.subr.mxu0 0.0
          %742 = vmatpush1.msra.mxu0 0.0
          %743 = vmatprep.subr.mxu0 0.0
          %744 = vmatpush1.msra.mxu0 0.0
          %745 = vmatprep.subr.mxu0 0.0
          %746 = vmatpush1.msra.mxu0 0.0
          %747 = vmatprep.subr.mxu0 0.0
          %748 = vmatpush1.msra.mxu0 0.0
          %749 = vmatprep.subr.mxu0 0.0
          %750 = vmatpush1.msra.mxu0 0.0
          %751 = vmatprep.subr.mxu0 0.0
          %752 = vmatpush1.msra.mxu0 0.0
          %753 = vmatprep.subr.mxu0 0.0
          %754 = vmatpush1.msra.mxu0 0.0
          %755 = vmatprep.subr.mxu0 0.0
          %756 = vmatpush1.msra.mxu0 0.0
          %757 = vmatprep.subr.mxu0 0.0
          %758 = vmatpush1.msra.mxu0 0.0
          %759 = vmatprep.subr.mxu0 0.0
          %760 = vmatpush1.msra.mxu0 0.0
          %761 = vmatprep.subr.mxu0 0.0
          %762 = vmatpush1.msra.mxu0 0.0
          %763 = vmatprep.subr.mxu0 0.0
          %764 = vmatpush1.msra.mxu0 0.0
          %765 = vmatprep.subr.mxu0 0.0
          %766 = vmatpush1.msra.mxu0 0.0
          %767 = vmatprep.mubr.f32.mxu0 0.0
          %768 = vmatmul.mubr.f32.gmra.mrb[0].mxu0 %v701
          %v769 = vpop.f32.mrb[0].mxu0
          %v770 = vadd.f32 0.0, %v769
          %v771 = vpop.f32.mrb[0].mxu0
          %772 = vdwg.mxu0
          %v773 = vlaneseq
          %v774 = vshrl.u32 %v773, 7
          %v775 = vsub.s32 0, %v774
          %v776 = vrot.slane %v770, %v775
          %v777 = vsub.f32 %v533, %v776
          %v778 = vsub.f32 %v534, %v776
          %v779 = vsub.f32 %v535, %v776
          %v780 = vsub.f32 %v536, %v776
          %v781 = vmul.f32 %v777, %v777
          %v782 = vmul.f32 %v778, %v778
          %v783 = vmul.f32 %v779, %v779
          %v784 = vmul.f32 %v780, %v780
          %785 = vmatprep.subr.mxu0 0.0
          %786 = vmatpush1.msra.mxu0 %v781
          %787 = vmatprep.subr.mxu0 0.0
          %788 = vmatpush1.msra.mxu0 %v782
          %789 = vmatprep.subr.mxu0 0.0
          %790 = vmatpush1.msra.mxu0 %v783
          %791 = vmatprep.subr.mxu0 0.0
          %792 = vmatpush1.msra.mxu0 %v784
          %793 = vmatprep.subr.mxu0 0.0
          %794 = vmatpush1.msra.mxu0 0.0
          %795 = vmatprep.subr.mxu0 0.0
          %796 = vmatpush1.msra.mxu0 0.0
          %797 = vmatprep.subr.mxu0 0.0
          %798 = vmatpush1.msra.mxu0 0.0
          %799 = vmatprep.subr.mxu0 0.0
          %800 = vmatpush1.msra.mxu0 0.0
          %801 = vmatprep.subr.mxu0 0.0
          %802 = vmatpush1.msra.mxu0 0.0
          %803 = vmatprep.subr.mxu0 0.0
          %804 = vmatpush1.msra.mxu0 0.0
          %805 = vmatprep.subr.mxu0 0.0
          %806 = vmatpush1.msra.mxu0 0.0
          %807 = vmatprep.subr.mxu0 0.0
          %808 = vmatpush1.msra.mxu0 0.0
          %809 = vmatprep.subr.mxu0 0.0
          %810 = vmatpush1.msra.mxu0 0.0
          %811 = vmatprep.subr.mxu0 0.0
          %812 = vmatpush1.msra.mxu0 0.0
          %813 = vmatprep.subr.mxu0 0.0
          %814 = vmatpush1.msra.mxu0 0.0
          %815 = vmatprep.subr.mxu0 0.0
          %816 = vmatpush1.msra.mxu0 0.0
          %817 = vmatprep.subr.mxu0 0.0
          %818 = vmatpush1.msra.mxu0 0.0
          %819 = vmatprep.subr.mxu0 0.0
          %820 = vmatpush1.msra.mxu0 0.0
          %821 = vmatprep.subr.mxu0 0.0
          %822 = vmatpush1.msra.mxu0 0.0
          %823 = vmatprep.subr.mxu0 0.0
          %824 = vmatpush1.msra.mxu0 0.0
          %825 = vmatprep.subr.mxu0 0.0
          %826 = vmatpush1.msra.mxu0 0.0
          %827 = vmatprep.subr.mxu0 0.0
          %828 = vmatpush1.msra.mxu0 0.0
          %829 = vmatprep.subr.mxu0 0.0
          %830 = vmatpush1.msra.mxu0 0.0
          %831 = vmatprep.subr.mxu0 0.0
          %832 = vmatpush1.msra.mxu0 0.0
          %833 = vmatprep.subr.mxu0 0.0
          %834 = vmatpush1.msra.mxu0 0.0
          %835 = vmatprep.subr.mxu0 0.0
          %836 = vmatpush1.msra.mxu0 0.0
          %837 = vmatprep.subr.mxu0 0.0
          %838 = vmatpush1.msra.mxu0 0.0
          %839 = vmatprep.subr.mxu0 0.0
          %840 = vmatpush1.msra.mxu0 0.0
          %841 = vmatprep.subr.mxu0 0.0
          %842 = vmatpush1.msra.mxu0 0.0
          %843 = vmatprep.subr.mxu0 0.0
          %844 = vmatpush1.msra.mxu0 0.0
          %845 = vmatprep.subr.mxu0 0.0
          %846 = vmatpush1.msra.mxu0 0.0
          %847 = vmatprep.subr.mxu0 0.0
          %848 = vmatpush1.msra.mxu0 0.0
          %849 = vmatprep.mubr.f32.mxu0 0.0
          %850 = vmatmul.mubr.f32.gmra.mrb[0].mxu0 %v539
          %v851 = vpop.f32.mrb[0].mxu0
          %v852 = vadd.f32 0.0, %v851
          %v853 = vpop.f32.mrb[0].mxu0
          %854 = vdwg.mxu0
          %855 = vmatprep.subr.mxu0 0.0
          %856 = vmatpush1.msra.mxu0 %v611
          %857 = vmatprep.subr.mxu0 0.0
          %858 = vmatpush1.msra.mxu0 %v612
          %859 = vmatprep.subr.mxu0 0.0
          %860 = vmatpush1.msra.mxu0 %v613
          %861 = vmatprep.subr.mxu0 0.0
          %862 = vmatpush1.msra.mxu0 %v614
          %863 = vmatprep.subr.mxu0 0.0
          %864 = vmatpush1.msra.mxu0 %v615
          %865 = vmatprep.subr.mxu0 0.0
          %866 = vmatpush1.msra.mxu0 %v616
          %867 = vmatprep.subr.mxu0 0.0
          %868 = vmatpush1.msra.mxu0 %v617
          %869 = vmatprep.subr.mxu0 0.0
          %870 = vmatpush1.msra.mxu0 %v618
          %871 = vmatprep.subr.mxu0 0.0
          %872 = vmatpush1.msra.mxu0 %v619
          %873 = vmatprep.subr.mxu0 0.0
          %874 = vmatpush1.msra.mxu0 %v620
          %875 = vmatprep.subr.mxu0 0.0
          %876 = vmatpush1.msra.mxu0 %v621
          %877 = vmatprep.subr.mxu0 0.0
          %878 = vmatpush1.msra.mxu0 %v622
          %879 = vmatprep.subr.mxu0 0.0
          %880 = vmatpush1.msra.mxu0 %v623
          %881 = vmatprep.subr.mxu0 0.0
          %882 = vmatpush1.msra.mxu0 %v624
          %883 = vmatprep.subr.mxu0 0.0
          %884 = vmatpush1.msra.mxu0 %v625
          %885 = vmatprep.subr.mxu0 0.0
          %886 = vmatpush1.msra.mxu0 %v626
          %887 = vmatprep.subr.mxu0 0.0
          %888 = vmatpush1.msra.mxu0 0.0
          %889 = vmatprep.subr.mxu0 0.0
          %890 = vmatpush1.msra.mxu0 0.0
          %891 = vmatprep.subr.mxu0 0.0
          %892 = vmatpush1.msra.mxu0 0.0
          %893 = vmatprep.subr.mxu0 0.0
          %894 = vmatpush1.msra.mxu0 0.0
          %895 = vmatprep.subr.mxu0 0.0
          %896 = vmatpush1.msra.mxu0 0.0
          %897 = vmatprep.subr.mxu0 0.0
          %898 = vmatpush1.msra.mxu0 0.0
          %899 = vmatprep.subr.mxu0 0.0
          %900 = vmatpush1.msra.mxu0 0.0
          %901 = vmatprep.subr.mxu0 0.0
          %902 = vmatpush1.msra.mxu0 0.0
          %903 = vmatprep.subr.mxu0 0.0
          %904 = vmatpush1.msra.mxu0 0.0
          %905 = vmatprep.subr.mxu0 0.0
          %906 = vmatpush1.msra.mxu0 0.0
          %907 = vmatprep.subr.mxu0 0.0
          %908 = vmatpush1.msra.mxu0 0.0
          %909 = vmatprep.subr.mxu0 0.0
          %910 = vmatpush1.msra.mxu0 0.0
          %911 = vmatprep.subr.mxu0 0.0
          %912 = vmatpush1.msra.mxu0 0.0
          %913 = vmatprep.subr.mxu0 0.0
          %914 = vmatpush1.msra.mxu0 0.0
          %915 = vmatprep.subr.mxu0 0.0
          %916 = vmatpush1.msra.mxu0 0.0
          %917 = vmatprep.subr.mxu0 0.0
          %918 = vmatpush1.msra.mxu0 0.0
          %919 = vmatprep.mubr.f32.mxu0 0.0
          %920 = vmatmul.mubr.f32.gmra.mrb[0].mxu0 %v852
          %v921 = vpop.f32.mrb[0].mxu0
          %v922 = vadd.f32 0.0, %v921
          %v923 = vpop.f32.mrb[0].mxu0
          %924 = vdwg.mxu0
          %v925 = vmul.f32 %v922, 0.001953125
          %v926 = vld [vmem:[%s4] sm:$0x1]
          %v927 = vadd.f32 %v925, 1e-05
          %v928 = vrsqrt.pop %v927
          %v929 = vmul.f32 %v926, %v928
          %v931 = vsel %vm699, %v929, 0
          %933 = vmatprep.subr.mxu0 0.0
          %934 = vmatpush1.msra.mxu0 %v698
          %935 = vmatprep.subr.mxu0 0.0
          %936 = vmatpush1.msra.mxu0 0.0
          %937 = vmatprep.subr.mxu0 0.0
          %938 = vmatpush1.msra.mxu0 0.0
          %939 = vmatprep.subr.mxu0 0.0
          %940 = vmatpush1.msra.mxu0 0.0
          %941 = vmatprep.subr.mxu0 0.0
          %942 = vmatpush1.msra.mxu0 0.0
          %943 = vmatprep.subr.mxu0 0.0
          %944 = vmatpush1.msra.mxu0 0.0
          %945 = vmatprep.subr.mxu0 0.0
          %946 = vmatpush1.msra.mxu0 0.0
          %947 = vmatprep.subr.mxu0 0.0
          %948 = vmatpush1.msra.mxu0 0.0
          %949 = vmatprep.subr.mxu0 0.0
          %950 = vmatpush1.msra.mxu0 0.0
          %951 = vmatprep.subr.mxu0 0.0
          %952 = vmatpush1.msra.mxu0 0.0
          %953 = vmatprep.subr.mxu0 0.0
          %954 = vmatpush1.msra.mxu0 0.0
          %955 = vmatprep.subr.mxu0 0.0
          %956 = vmatpush1.msra.mxu0 0.0
          %957 = vmatprep.subr.mxu0 0.0
          %958 = vmatpush1.msra.mxu0 0.0
          %959 = vmatprep.subr.mxu0 0.0
          %960 = vmatpush1.msra.mxu0 0.0
          %961 = vmatprep.subr.mxu0 0.0
          %962 = vmatpush1.msra.mxu0 0.0
          %963 = vmatprep.subr.mxu0 0.0
          %964 = vmatpush1.msra.mxu0 0.0
          %965 = vmatprep.subr.mxu0 0.0
          %966 = vmatpush1.msra.mxu0 0.0
          %967 = vmatprep.subr.mxu0 0.0
          %968 = vmatpush1.msra.mxu0 0.0
          %969 = vmatprep.subr.mxu0 0.0
          %970 = vmatpush1.msra.mxu0 0.0
          %971 = vmatprep.subr.mxu0 0.0
          %972 = vmatpush1.msra.mxu0 0.0
          %973 = vmatprep.subr.mxu0 0.0
          %974 = vmatpush1.msra.mxu0 0.0
          %975 = vmatprep.subr.mxu0 0.0
          %976 = vmatpush1.msra.mxu0 0.0
          %977 = vmatprep.subr.mxu0 0.0
          %978 = vmatpush1.msra.mxu0 0.0
          %979 = vmatprep.subr.mxu0 0.0
          %980 = vmatpush1.msra.mxu0 0.0
          %981 = vmatprep.subr.mxu0 0.0
          %982 = vmatpush1.msra.mxu0 0.0
          %983 = vmatprep.subr.mxu0 0.0
          %984 = vmatpush1.msra.mxu0 0.0
          %985 = vmatprep.subr.mxu0 0.0
          %986 = vmatpush1.msra.mxu0 0.0
          %987 = vmatprep.subr.mxu0 0.0
          %988 = vmatpush1.msra.mxu0 0.0
          %989 = vmatprep.subr.mxu0 0.0
          %990 = vmatpush1.msra.mxu0 0.0
          %991 = vmatprep.subr.mxu0 0.0
          %992 = vmatpush1.msra.mxu0 0.0
          %993 = vmatprep.subr.mxu0 0.0
          %994 = vmatpush1.msra.mxu0 0.0
          %995 = vmatprep.subr.mxu0 0.0
          %996 = vmatpush1.msra.mxu0 0.0
          %997 = vmatprep.mubr.f32.mxu0 0.0
          %998 = vmatmul.mubr.f32.gmra.mrb[0].mxu0 %v931
          %v999 = vpop.f32.mrb[0].mxu0
          %v1000 = vadd.f32 0.0, %v999
          %v1001 = vpop.f32.mrb[0].mxu0
          %1002 = vdwg.mxu0
          %v1003 = vld [vmem:[%s5] sm:$0x1]
          %v1005 = vsel %vm699, %v1003, 0
          %1007 = vmatprep.subr.mxu0 0.0
          %1008 = vmatpush1.msra.mxu0 %v698
          %1009 = vmatprep.subr.mxu0 0.0
          %1010 = vmatpush1.msra.mxu0 0.0
          %1011 = vmatprep.subr.mxu0 0.0
          %1012 = vmatpush1.msra.mxu0 0.0
          %1013 = vmatprep.subr.mxu0 0.0
          %1014 = vmatpush1.msra.mxu0 0.0
          %1015 = vmatprep.subr.mxu0 0.0
          %1016 = vmatpush1.msra.mxu0 0.0
          %1017 = vmatprep.subr.mxu0 0.0
          %1018 = vmatpush1.msra.mxu0 0.0
          %1019 = vmatprep.subr.mxu0 0.0
          %1020 = vmatpush1.msra.mxu0 0.0
          %1021 = vmatprep.subr.mxu0 0.0
          %1022 = vmatpush1.msra.mxu0 0.0
          %1023 = vmatprep.subr.mxu0 0.0
          %1024 = vmatpush1.msra.mxu0 0.0
          %1025 = vmatprep.subr.mxu0 0.0
          %1026 = vmatpush1.msra.mxu0 0.0
          %1027 = vmatprep.subr.mxu0 0.0
          %1028 = vmatpush1.msra.mxu0 0.0
          %1029 = vmatprep.subr.mxu0 0.0
          %1030 = vmatpush1.msra.mxu0 0.0
          %1031 = vmatprep.subr.mxu0 0.0
          %1032 = vmatpush1.msra.mxu0 0.0
          %1033 = vmatprep.subr.mxu0 0.0
          %1034 = vmatpush1.msra.mxu0 0.0
          %1035 = vmatprep.subr.mxu0 0.0
          %1036 = vmatpush1.msra.mxu0 0.0
          %1037 = vmatprep.subr.mxu0 0.0
          %1038 = vmatpush1.msra.mxu0 0.0
          %1039 = vmatprep.subr.mxu0 0.0
          %1040 = vmatpush1.msra.mxu0 0.0
          %1041 = vmatprep.subr.mxu0 0.0
          %1042 = vmatpush1.msra.mxu0 0.0
          %1043 = vmatprep.subr.mxu0 0.0
          %1044 = vmatpush1.msra.mxu0 0.0
          %1045 = vmatprep.subr.mxu0 0.0
          %1046 = vmatpush1.msra.mxu0 0.0
          %1047 = vmatprep.subr.mxu0 0.0
          %1048 = vmatpush1.msra.mxu0 0.0
          %1049 = vmatprep.subr.mxu0 0.0
          %1050 = vmatpush1.msra.mxu0 0.0
          %1051 = vmatprep.subr.mxu0 0.0
          %1052 = vmatpush1.msra.mxu0 0.0
          %1053 = vmatprep.subr.mxu0 0.0
          %1054 = vmatpush1.msra.mxu0 0.0
          %1055 = vmatprep.subr.mxu0 0.0
          %1056 = vmatpush1.msra.mxu0 0.0
          %1057 = vmatprep.subr.mxu0 0.0
          %1058 = vmatpush1.msra.mxu0 0.0
          %1059 = vmatprep.subr.mxu0 0.0
          %1060 = vmatpush1.msra.mxu0 0.0
          %1061 = vmatprep.subr.mxu0 0.0
          %1062 = vmatpush1.msra.mxu0 0.0
          %1063 = vmatprep.subr.mxu0 0.0
          %1064 = vmatpush1.msra.mxu0 0.0
          %1065 = vmatprep.subr.mxu0 0.0
          %1066 = vmatpush1.msra.mxu0 0.0
          %1067 = vmatprep.subr.mxu0 0.0
          %1068 = vmatpush1.msra.mxu0 0.0
          %1069 = vmatprep.subr.mxu0 0.0
          %1070 = vmatpush1.msra.mxu0 0.0
          %1071 = vmatprep.mubr.f32.mxu0 0.0
          %1072 = vmatmul.mubr.f32.gmra.mrb[0].mxu0 %v1005
          %v1073 = vpop.f32.mrb[0].mxu0
          %v1074 = vadd.f32 0.0, %v1073
          %v1075 = vpop.f32.mrb[0].mxu0
          %1076 = vdwg.mxu0
          %v1077 = vlaneseq
          %v1078 = vshrl.u32 %v1077, 7
          %v1079 = vsub.s32 0, %v1078
          %v1080 = vrot.slane %v1000, %v1079
          %v1081 = vmul.f32 %v777, %v1080
          %v1082 = vmul.f32 %v778, %v1080
          %v1083 = vmul.f32 %v779, %v1080
          %v1084 = vmul.f32 %v780, %v1080
          %v1085 = vlaneseq
          %v1086 = vshrl.u32 %v1085, 7
          %v1087 = vsub.s32 0, %v1086
          %v1088 = vrot.slane %v1074, %v1087
          %v1089 = vadd.f32 %v1081, %v1088
          %v1090 = vadd.f32 %v1082, %v1088
          %v1091 = vadd.f32 %v1083, %v1088
          %v1092 = vadd.f32 %v1084, %v1088
          %vm1093 = vcmp.ge.f32.partialorder %v1089, 0.0
          %vm1094 = vcmp.ge.f32.partialorder %v1090, 0.0
          %vm1095 = vcmp.ge.f32.partialorder %v1091, 0.0
          %vm1096 = vcmp.ge.f32.partialorder %v1092, 0.0
          %v1097 = vmul.f32 %v1089, 0.1
          %v1098 = vmul.f32 %v1090, 0.1
          %v1099 = vmul.f32 %v1091, 0.1
          %v1100 = vmul.f32 %v1092, 0.1
          %v1101 = vsel %vm1093, %v1089, %v1097
          %v1102 = vsel %vm1094, %v1090, %v1098
          %v1103 = vsel %vm1095, %v1091, %v1099
          %v1104 = vsel %vm1096, %v1092, %v1100
          %1105 = vst [vmem:[#allocation2] sm:$0xff] %v1101
          %1106 = vst [vmem:[#allocation2 + $0x8] sm:$0xff] %v1102
          %1107 = vst [vmem:[#allocation2 + $0x10] sm:$0xff] %v1103
          %1108 = vst [vmem:[#allocation2 + $0x18] sm:$0xff] %v1104
        $region48: #{tpu_custom_call.1} parent=43 // pred_fallthru
          _
        // Predicated region
        $region49: #{tpu_custom_call.1} parent=43 // pred_check
          %p1109 = pneg %p162
        $region50: #{tpu_custom_call.1} parent=43 // pred_check_branch
          %1111 = sbr.rel (%p1109) target = $region52
        $region51: #{tpu_custom_call.1} parent=43 // pred_region
          %s1113 = ssub.s32 512, 512
          %1114 = vsyncadd [#allocation3], %s1113
          %s1115 = sshll.u32 [#allocation2], 4
          %s1116 = int_to_ptr.vmem [resolvable:$true] %s1115
          %1121 = dma.vmem_to_hbm [thread:$0]  %s1116, 512, %s6, [#allocation3], 128, 128, 8
        $region52: #{tpu_custom_call.1} parent=43 // pred_fallthru
          _
        // Predicated region
        $region53: #{tpu_custom_call.1} parent=43 // pred_check
          %p1122 = pneg %p162
        $region54: #{tpu_custom_call.1} parent=43 // pred_check_branch
          %1124 = sbr.rel (%p1122) target = $region56
        $region55: #{tpu_custom_call.1} parent=43 // pred_region
          %1125 = dma.done [#allocation3], 512
        $region56: #{tpu_custom_call.1} parent=43 // pred_fallthru
          _
      $region44: #{tpu_custom_call.1} parent=5 // pred_fallthru
        _
      %p1126 = scmp.le.s32.totalorder 2, %s13
      // Predicated region
      $region57: #{tpu_custom_call.1} parent=5 // pred_check
        %p1127 = pneg %p1126
      $region58: #{tpu_custom_call.1} parent=5 // pred_check_branch
        %1129 = sbr.rel (%p1127) target = $region60
      $region59: #{tpu_custom_call.1} parent=5 // pred_region
        %s1130 = ssub.s32 %s13, 2
      $region60: #{tpu_custom_call.1} parent=5 // pred_fallthru
        _
    $region6: #{tpu_custom_call.1} parent=1 // loop_footer
      %s17 = sadd.s32 1, %s13
    $region7: #{tpu_custom_call.1} parent=1 // loop_footer_branch
      %12 = sbr.rel target = $region3
    $region8: #{tpu_custom_call.1} parent=1 // loop_exit
      _
    %1131 = vsyncpa [#allocation3], 1
    %s1132 = scalar_lea.sflag [#allocation3], 1
    %1133 = vsyncpa %s1132, 1

</llo_original>
